<compile_context>
chip_gen: v7x
topology: tpu7x:2x2x1
jax: 0.10.0
libtpu: 0.0.40
codegen_flags: <defaults>
</compile_context>

<pallas_src>
import jax
import jax.numpy as jnp
from jax.experimental import pallas as pl
from jax.experimental.pallas import tpu as pltpu

EPS = 1e-16          # module's self.eps (representable in float32)
TEMPERATURE = 5.0    # module's self.temperture


def _lp_pool1d_kernel(x_ref, w_ref, p_ref, ip_ref, o_ref):
    """One (L-tile, B-tile) grid cell.

    x_ref:  (TB, K, TL) f32  input taps (taps on sublanes, L on lanes)
    w_ref:  (K, TL)     f32  w_prime * (1/K)  (mean scale pre-folded)
    p_ref:  (1, TL)     f32  p_prime   = exp(p_norm)
    ip_ref: (1, TL)     f32  1/p_prime = exp(-p_norm)
    o_ref:  (TB, 1, TL) f32  pooled output rows
    """
    x = x_ref[...]                              # (TB, K, TL)
    p = p_ref[...][None]                        # (1, 1, TL)
    ip = ip_ref[...][None]                      # (1, 1, TL)
    w = w_ref[...][None]                        # (1, K, TL)

    z = jnp.power(jnp.abs(x) + EPS, p)          # |x|^p  (EUP log+exp, lane-dense)
    z = (z + EPS) * w                           # weights carry the 1/K mean scale
    acc = jnp.sum(z, axis=1, keepdims=True)     # XLU sublane reduce over K taps
    o_ref[...] = jnp.power(acc + EPS, ip).astype(o_ref.dtype)


def _pick_tiles(B, L, K):
    """Choose (batch_tile, l_tile) for an L padded to a multiple of 128."""
    # L tile: largest lane-dense candidate dividing L, preferring >= 2 grid
    # steps along L so a v7x megacore gets work on both TensorCores. Extra
    # steps on single-TC chips cost only ~0.35 us each at these tile sizes.
    candidates = (4096, 2048, 1024, 512, 256, 128)
    lt = None
    for t in candidates:
        if L % t == 0 and L // t >= 2:
            lt = t
            break
    if lt is None:
        for t in candidates:
            if L % t == 0:
                lt = t
                break
    if lt is None:
        lt = L  # L < 128 (block equals full array dim)

    # B tile: fold the whole batch when small; otherwise cap so each x buffer
    # stays a few MiB (x is double-buffered) inside the scoped VMEM default.
    max_bt = max(1, (4 * 1024 * 1024) // (max(K, 1) * lt * 4))
    bt = 1
    for cand in range(min(B, max_bt), 0, -1):
        if B % cand == 0:
            bt = cand
            break
    return bt, lt


@jax.jit
def lp_pooling1d_forward(x, mask, p_norm):
    """Replicates lp_pooling1d.forward((_, x)) with pooling_operation='Non_LSE'.

    x:      (B, L, K) float32   (the PyTorch x[1])
    mask:   (L, K)    float32   Parameter `mask`
    p_norm: (L,)      float32   Parameter `p_norm`
    returns (z, w_prime): z (B, 1, L) float32, w_prime (1, L, K) float32
    """
    B, L, K = x.shape

    # Parameter transforms (cheap glue, fused by XLA under jit).
    w_prime = jax.nn.sigmoid(mask.astype(jnp.float32) * TEMPERATURE)   # (L, K)
    p_prime = jnp.exp(p_norm.astype(jnp.float32))                      # (L,)
    inv_p = jnp.exp(-p_norm.astype(jnp.float32))                       # == 1/p_prime

    # Layout glue: put L on lanes. allow_input_fusion lets XLA fold this
    # transpose into the Pallas input DMA instead of a separate HBM round trip.
    x_t = jnp.swapaxes(x.astype(jnp.float32), 1, 2)                    # (B, K, L)
    w_t = jnp.swapaxes(w_prime, 0, 1) * (1.0 / K)                      # (K, L), mean folded
    p2 = p_prime.reshape(1, L)
    ip2 = inv_p.reshape(1, L)

    # Pad L to a lane multiple so every block is lane-aligned (no masked stores).
    Lp = L if L % 128 == 0 else ((L + 127) // 128) * 128
    if Lp != L:
        pad = Lp - L
        x_t = jnp.pad(x_t, ((0, 0), (0, 0), (0, pad)))
        w_t = jnp.pad(w_t, ((0, 0), (0, pad)))
        p2 = jnp.pad(p2, ((0, 0), (0, pad)), constant_values=1.0)
        ip2 = jnp.pad(ip2, ((0, 0), (0, pad)), constant_values=1.0)

    bt, lt = _pick_tiles(B, Lp, K)
    grid = (Lp // lt, B // bt)   # B innermost: w/p/ip blocks stay VMEM-resident

    cost = pl.CostEstimate(
        flops=4 * B * Lp * K,
        transcendentals=2 * B * Lp * (K + 1),
        bytes_accessed=4 * (B * Lp * K + B * Lp + (K + 2) * Lp),
    )

    z = pl.pallas_call(
        _lp_pool1d_kernel,
        out_shape=jax.ShapeDtypeStruct((B, 1, Lp), jnp.float32),
        grid_spec=pltpu.PrefetchScalarGridSpec(
            num_scalar_prefetch=0,
            grid=grid,
            in_specs=[
                pl.BlockSpec((bt, K, lt), lambda l, b: (b, 0, l)),
                pl.BlockSpec((K, lt), lambda l, b: (0, l)),
                pl.BlockSpec((1, lt), lambda l, b: (0, l)),
                pl.BlockSpec((1, lt), lambda l, b: (0, l)),
            ],
            out_specs=pl.BlockSpec((bt, 1, lt), lambda l, b: (b, 0, l)),
        ),
        compiler_params=pltpu.CompilerParams(
            dimension_semantics=("parallel", "parallel"),
            allow_input_fusion=[True, False, False, False],
        ),
        cost_estimate=cost,
    )(x_t, w_t, p2, ip2)

    if Lp != L:
        z = z[:, :, :L]

    # PyTorch returns (z, w_prime) with w_prime = sigmoid(mask.unsqueeze(0)*T).
    return z, w_prime[None]                                            # (1, L, K)


if __name__ == "__main__":
    B, L, K = 2, 1024, 8        # batch, args.output_size, taps per window
    key = jax.random.PRNGKey(0)
    kx, km = jax.random.split(key)
    x = jax.random.normal(kx, (B, L, K), dtype=jnp.float32)
    mask = jax.random.normal(km, (L, K), dtype=jnp.float32)            # Parameter `mask`
    p_norm = jnp.zeros((L,), dtype=jnp.float32) + 2.0                  # Parameter `p_norm` (zeros + 2)

    z, w = lp_pooling1d_forward(x, mask, p_norm)
    jax.block_until_ready((z, w))

    assert z.shape == (B, 1, L) and z.dtype == jnp.float32
    assert w.shape == (1, L, K) and w.dtype == jnp.float32

    # Pure-JAX reference (same f32 math as the PyTorch Non_LSE branch).
    w_ref_ = jax.nn.sigmoid(mask * TEMPERATURE)[None]                  # (1, L, K)
    p_ref_ = jnp.exp(p_norm)[None, :, None]                            # (1, L, 1)
    zr = jnp.abs(x)
    zr = jnp.power(zr + EPS, p_ref_)
    zr = (zr + EPS) * w_ref_
    zr = jnp.mean(zr, axis=2, keepdims=True)
    zr = jnp.power(zr + EPS, 1.0 / p_ref_)
    zr = zr.reshape(B, L)[:, None, :]                                  # (B, 1, L)

    assert jnp.allclose(z, zr, rtol=5e-3, atol=1e-5)
    assert jnp.allclose(w, w_ref_, rtol=1e-6, atol=1e-6)
    print("KERNEL_OK")
</pallas_src>

<mosaic_0001>
module attributes {stable_mosaic.version = 11 : i64} {
  func.func @_lp_pool1d_kernel(%arg0: i32, %arg1: i32, %arg2: memref<2x8x512xf32, #tpu.memory_space<vmem>>, %arg3: memref<8x512xf32, #tpu.memory_space<vmem>>, %arg4: memref<1x512xf32, #tpu.memory_space<vmem>>, %arg5: memref<1x512xf32, #tpu.memory_space<vmem>>, %arg6: memref<2x1x512xf32, #tpu.memory_space<vmem>>) attributes {dimension_semantics = [#tpu.dimension_semantics<parallel>, #tpu.dimension_semantics<parallel>], iteration_bounds = array<i64: 2, 1>, scalar_prefetch = 0 : i64, scratch_operands = 0 : i64, tpu.core_type = #tpu.core_type<tc>, window_params = [{transform_indices = @transform_0, window_bounds = array<i64: 2, 8, 512>}, {transform_indices = @transform_1, window_bounds = array<i64: 8, 512>}, {transform_indices = @transform_2, window_bounds = array<i64: 1, 512>}, {transform_indices = @transform_3, window_bounds = array<i64: 1, 512>}, {transform_indices = @transform_4, window_bounds = array<i64: 2, 1, 512>}]} {
    %c0 = arith.constant 0 : index
    %c0_0 = arith.constant 0 : index
    %c0_1 = arith.constant 0 : index
    %0 = vector.load %arg2[%c0, %c0_0, %c0_1] : memref<2x8x512xf32, #tpu.memory_space<vmem>>, vector<2x8x512xf32>
    %c0_2 = arith.constant 0 : index
    %c0_3 = arith.constant 0 : index
    %1 = vector.load %arg4[%c0_2, %c0_3] : memref<1x512xf32, #tpu.memory_space<vmem>>, vector<1x512xf32>
    %2 = vector.shape_cast %1 : vector<1x512xf32> to vector<1x1x512xf32>
    %c0_4 = arith.constant 0 : index
    %c0_5 = arith.constant 0 : index
    %3 = vector.load %arg5[%c0_4, %c0_5] : memref<1x512xf32, #tpu.memory_space<vmem>>, vector<1x512xf32>
    %4 = vector.shape_cast %3 : vector<1x512xf32> to vector<1x1x512xf32>
    %c0_6 = arith.constant 0 : index
    %c0_7 = arith.constant 0 : index
    %5 = vector.load %arg3[%c0_6, %c0_7] : memref<8x512xf32, #tpu.memory_space<vmem>>, vector<8x512xf32>
    %6 = vector.shape_cast %5 : vector<8x512xf32> to vector<1x8x512xf32>
    %7 = math.absf %0 : vector<2x8x512xf32>
    %cst = arith.constant 1.000000e-16 : f32
    %8 = vector.broadcast %cst : f32 to vector<2x8x512xf32>
    %9 = arith.addf %7, %8 : vector<2x8x512xf32>
    %10 = vector.broadcast %2 : vector<1x1x512xf32> to vector<2x8x512xf32>
    %11 = math.powf %9, %10 : vector<2x8x512xf32>
    %cst_8 = arith.constant 1.000000e-16 : f32
    %12 = vector.broadcast %cst_8 : f32 to vector<2x8x512xf32>
    %13 = arith.addf %11, %12 : vector<2x8x512xf32>
    %14 = vector.broadcast %6 : vector<1x8x512xf32> to vector<2x8x512xf32>
    %15 = arith.mulf %13, %14 : vector<2x8x512xf32>
    %cst_9 = arith.constant dense<0.000000e+00> : vector<2x512xf32>
    %16 = vector.multi_reduction <add>, %15, %cst_9 [1] : vector<2x8x512xf32> to vector<2x512xf32>
    %17 = vector.shape_cast %16 : vector<2x512xf32> to vector<2x1x512xf32>
    %cst_10 = arith.constant 1.000000e-16 : f32
    %18 = vector.broadcast %cst_10 : f32 to vector<2x1x512xf32>
    %19 = arith.addf %17, %18 : vector<2x1x512xf32>
    %20 = vector.broadcast %4 : vector<1x1x512xf32> to vector<2x1x512xf32>
    %21 = math.powf %19, %20 : vector<2x1x512xf32>
    %c0_11 = arith.constant 0 : index
    %c0_12 = arith.constant 0 : index
    %c0_13 = arith.constant 0 : index
    %22 = vector.load %arg6[%c0_11, %c0_12, %c0_13] : memref<2x1x512xf32, #tpu.memory_space<vmem>>, vector<2x1x512xf32>
    tpu.vector_store %arg6[%c0_11, %c0_12, %c0_13], %21 {strides = array<i32>} : memref<2x1x512xf32, #tpu.memory_space<vmem>>, vector<2x1x512xf32>,
    return
  }
  func.func @transform_0(%arg0: i32, %arg1: i32) -> (i32, i32, i32) {
    %c0_i32 = arith.constant 0 : i32
    %c0_i32_0 = arith.constant 0 : i32
    return %arg1, %c0_i32, %arg0 : i32, i32, i32
  }
  func.func @transform_1(%arg0: i32, %arg1: i32) -> (i32, i32) {
    %c0_i32 = arith.constant 0 : i32
    %c0_i32_0 = arith.constant 0 : i32
    return %c0_i32, %arg0 : i32, i32
  }
  func.func @transform_2(%arg0: i32, %arg1: i32) -> (i32, i32) {
    %c0_i32 = arith.constant 0 : i32
    %c0_i32_0 = arith.constant 0 : i32
    return %c0_i32, %arg0 : i32, i32
  }
  func.func @transform_3(%arg0: i32, %arg1: i32) -> (i32, i32) {
    %c0_i32 = arith.constant 0 : i32
    %c0_i32_0 = arith.constant 0 : i32
    return %c0_i32, %arg0 : i32, i32
  }
  func.func @transform_4(%arg0: i32, %arg1: i32) -> (i32, i32, i32) {
    %c0_i32 = arith.constant 0 : i32
    %c0_i32_0 = arith.constant 0 : i32
    return %arg1, %c0_i32, %arg0 : i32, i32, i32
  }
}

</mosaic_0001>

<llo_original>
// kernel: lp_pooling1d_forward.2
$region0: #{lp_pooling1d_forward.2}
  #allocation0 [shape = 'u32[]', space=smem, size = 0x4, offset = 0x4, fixed_abs, tag = 'smem constant byte address 0x4 - core index']
  #allocation1 [shape = 'u32[144,128]{1,0:T(1,128)}', space=vmem, size = 0x12000, scoped, tag = 'internal scratch']
  %s0 = inlined_call_operand.vmem [shape: f32[8,1024], index: 0, kind: input, shape index: {}]
  %s1 = inlined_call_operand.vmem [shape: f32[1,1024], index: 1, kind: input, shape index: {}]
  %s2 = inlined_call_operand.vmem [shape: f32[1,1024], index: 2, kind: input, shape index: {}]
  %s3 = inlined_call_operand.vmem [shape: f32[2,1024,8], index: 3, kind: input, shape index: {}]
  %s4 = inlined_call_operand.hbm [shape: f32[2,1,1024], index: 4, kind: output, shape index: {}]
  %s5 = sld [smem:[#allocation0]]
  $region49: #{lp_pooling1d_forward.2} parent=0
    _
  %s7 = ssub.s32 1, %s5
  %s8 = scalar_select 0, %s7, %s5
  $region1: #{lp_pooling1d_forward.2} parent=0
    #allocation2 [shape = 'u8[8192]{0}', space=vmem, size = 0x2000, scoped, tag = 'output window, operand 0']
    #allocation3 [shape = 's32[2]{0}', space=sflag, size = 0x8, scoped, tag = 'scoped memory for lp_pooling1d_forward.2']
    %9 = vsyncpa [#allocation3], 0
    %s10 = scalar_lea.sflag [#allocation3], 1
    %11 = vsyncpa %s10, 0
    loop: start=0, step=1, limit=4
    $region2: #{lp_pooling1d_forward.2} parent=1 // loop_pre_header
      _
    $region3: #{lp_pooling1d_forward.2} parent=1 // loop_header
      %s13 = sphi 0, %s17
      %p14 = scmp.ge.s32.totalorder %s13, 4
      %s20 = sphi 0, %s32
      %s21 = sphi 0, %s28
      %s22 = sphi 0, %s20
      %s23 = sphi 0, %s21
      %s24 = sphi 0, %s22
      %s25 = sphi 0, %s23
      %s37 = sphi 0, %s39
      %s40 = sphi 0, %s37
      %s41 = sphi 0, %s40
      %s57 = sphi 0, %s41
      %s63 = sphi 0, %s65
      %s66 = sphi 0, %s63
      %s67 = sphi 0, %s66
      %s83 = sphi 0, %s67
      %s89 = sphi 0, %s91
      %s92 = sphi 0, %s89
      %s93 = sphi 0, %s92
      %s109 = sphi 0, %s93
      %s115 = sphi 0, %s117
      %s118 = sphi 0, %s115
      %s119 = sphi 0, %s118
      %s135 = sphi 0, %s119
      %s143 = sphi 0, %s145
      %s146 = sphi 0, %s143
      %s147 = sphi 0, %s146
      %s163 = sphi 0, %s147
    $region4: #{lp_pooling1d_forward.2} parent=1 // loop_header_branch
      %16 = sbr.rel (%p14) target = $region8
    $region5: #{lp_pooling1d_forward.2} parent=1 // loop_body
      %s18 = ssub.s32 %s13, 1
      %s19 = ssub.s32 %s13, 2
      %s26 = sadd.s32 1, %s21
      %p27 = scmp.ge.s32.totalorder %s26, 1
      %s28 = scalar_select %p27, 0, %s26
      %s29 = sadd.s32 1, %s20
      %s30 = scalar_select %p27, %s29, %s20
      %p31 = scmp.ge.s32.totalorder %s30, 2
      %s32 = scalar_select %p31, 0, %s30
      %s33 = ssub.s32 %s21, %s28
      %s34 = ssub.s32 %s20, %s32
      %s35 = sor.u32 %s33, %s34
      %p36 = scmp.eq.s32.totalorder %s35, 0
      %s38 = sadd.s32 %s37, 1
      %s39 = scalar_select %p36, %s37, %s38
      %p42 = pneg %p36
      %p43 = scmp.eq.s32.totalorder %s13, 1
      %p44 = por %p42, %p43
      %p45 = scmp.ne.s32.totalorder %s37, %s40
      %p46 = scmp.eq.s32.totalorder %s13, 0
      %p47 = por %p45, %p46
      %p48 = scmp.ne.s32.totalorder %s37, %s40
      %p49 = scmp.eq.s32.totalorder %s18, 1
      %p50 = por %p48, %p49
      %p51 = scmp.ne.s32.totalorder %s40, %s41
      %p52 = scmp.eq.s32.totalorder %s18, 0
      %p53 = por %p51, %p52
      %p54 = scmp.ne.s32.totalorder %s40, %s41
      %p55 = scmp.eq.s32.totalorder %s19, 1
      %p56 = por %p54, %p55
      %p58 = scmp.ne.s32.totalorder %s41, %s57
      %p59 = scmp.eq.s32.totalorder %s19, 0
      %p60 = por %p58, %p59
      %s61 = ssub.s32 %s20, %s32
      %p62 = scmp.eq.s32.totalorder %s61, 0
      %s64 = sadd.s32 %s63, 1
      %s65 = scalar_select %p62, %s63, %s64
      %p68 = pneg %p62
      %p69 = scmp.eq.s32.totalorder %s13, 1
      %p70 = por %p68, %p69
      %p71 = scmp.ne.s32.totalorder %s63, %s66
      %p72 = scmp.eq.s32.totalorder %s13, 0
      %p73 = por %p71, %p72
      %p74 = scmp.ne.s32.totalorder %s63, %s66
      %p75 = scmp.eq.s32.totalorder %s18, 1
      %p76 = por %p74, %p75
      %p77 = scmp.ne.s32.totalorder %s66, %s67
      %p78 = scmp.eq.s32.totalorder %s18, 0
      %p79 = por %p77, %p78
      %p80 = scmp.ne.s32.totalorder %s66, %s67
      %p81 = scmp.eq.s32.totalorder %s19, 1
      %p82 = por %p80, %p81
      %p84 = scmp.ne.s32.totalorder %s67, %s83
      %p85 = scmp.eq.s32.totalorder %s19, 0
      %p86 = por %p84, %p85
      %s87 = ssub.s32 %s20, %s32
      %p88 = scmp.eq.s32.totalorder %s87, 0
      %s90 = sadd.s32 %s89, 1
      %s91 = scalar_select %p88, %s89, %s90
      %p94 = pneg %p88
      %p95 = scmp.eq.s32.totalorder %s13, 1
      %p96 = por %p94, %p95
      %p97 = scmp.ne.s32.totalorder %s89, %s92
      %p98 = scmp.eq.s32.totalorder %s13, 0
      %p99 = por %p97, %p98
      %p100 = scmp.ne.s32.totalorder %s89, %s92
      %p101 = scmp.eq.s32.totalorder %s18, 1
      %p102 = por %p100, %p101
      %p103 = scmp.ne.s32.totalorder %s92, %s93
      %p104 = scmp.eq.s32.totalorder %s18, 0
      %p105 = por %p103, %p104
      %p106 = scmp.ne.s32.totalorder %s92, %s93
      %p107 = scmp.eq.s32.totalorder %s19, 1
      %p108 = por %p106, %p107
      %p110 = scmp.ne.s32.totalorder %s93, %s109
      %p111 = scmp.eq.s32.totalorder %s19, 0
      %p112 = por %p110, %p111
      %s113 = ssub.s32 %s20, %s32
      %p114 = scmp.eq.s32.totalorder %s113, 0
      %s116 = sadd.s32 %s115, 1
      %s117 = scalar_select %p114, %s115, %s116
      %p120 = pneg %p114
      %p121 = scmp.eq.s32.totalorder %s13, 1
      %p122 = por %p120, %p121
      %p123 = scmp.ne.s32.totalorder %s115, %s118
      %p124 = scmp.eq.s32.totalorder %s13, 0
      %p125 = por %p123, %p124
      %p126 = scmp.ne.s32.totalorder %s115, %s118
      %p127 = scmp.eq.s32.totalorder %s18, 1
      %p128 = por %p126, %p127
      %p129 = scmp.ne.s32.totalorder %s118, %s119
      %p130 = scmp.eq.s32.totalorder %s18, 0
      %p131 = por %p129, %p130
      %p132 = scmp.ne.s32.totalorder %s118, %s119
      %p133 = scmp.eq.s32.totalorder %s19, 1
      %p134 = por %p132, %p133
      %p136 = scmp.ne.s32.totalorder %s119, %s135
      %p137 = scmp.eq.s32.totalorder %s19, 0
      %p138 = por %p136, %p137
      %s139 = ssub.s32 %s21, %s28
      %s140 = ssub.s32 %s20, %s32
      %s141 = sor.u32 %s139, %s140
      %p142 = scmp.eq.s32.totalorder %s141, 0
      %s144 = sadd.s32 %s143, 1
      %s145 = scalar_select %p142, %s143, %s144
      %p148 = pneg %p142
      %p149 = scmp.eq.s32.totalorder %s13, 1
      %p150 = por %p148, %p149
      %p151 = scmp.ne.s32.totalorder %s143, %s146
      %p152 = scmp.eq.s32.totalorder %s13, 0
      %p153 = por %p151, %p152
      %p154 = scmp.ne.s32.totalorder %s143, %s146
      %p155 = scmp.eq.s32.totalorder %s18, 1
      %p156 = por %p154, %p155
      %p157 = scmp.ne.s32.totalorder %s146, %s147
      %p158 = scmp.eq.s32.totalorder %s18, 0
      %p159 = por %p157, %p158
      %p160 = scmp.ne.s32.totalorder %s146, %s147
      %p161 = scmp.eq.s32.totalorder %s19, 1
      %p162 = por %p160, %p161
      %p164 = scmp.ne.s32.totalorder %s147, %s163
      %p165 = scmp.eq.s32.totalorder %s19, 0
      %p166 = por %p164, %p165
      %p167 = scmp.le.s32.totalorder 1, %s13
      %p168 = scmp.lt.s32.totalorder %s13, 3
      %p169 = pnand %p167, %p168
      %p170 = pneg %p169
      // Predicated region
      $region9: #{lp_pooling1d_forward.2} parent=5 // pred_check
        _
      $region10: #{lp_pooling1d_forward.2} parent=5 // pred_check_branch
        %172 = sbr.rel (%p169) target = $region12
      $region11: #{lp_pooling1d_forward.2} parent=5 // pred_region
        %s173 = ssub.s32 %s13, 1
      $region12: #{lp_pooling1d_forward.2} parent=5 // pred_fallthru
        _
      %p174 = scmp.lt.s32.totalorder %s13, 2
      // Predicated region
      $region13: #{lp_pooling1d_forward.2} parent=5 // pred_check
        %p175 = pneg %p174
      $region14: #{lp_pooling1d_forward.2} parent=5 // pred_check_branch
        %177 = sbr.rel (%p175) target = $region16
      $region15: #{lp_pooling1d_forward.2} parent=5 // pred_region
        // Predicated region
        $region17: #{lp_pooling1d_forward.2} parent=15 // pred_check
          %p178 = pneg %p47
        $region18: #{lp_pooling1d_forward.2} parent=15 // pred_check_branch
          %180 = sbr.rel (%p178) target = $region20
        $region19: #{lp_pooling1d_forward.2} parent=15 // pred_region
          %s181 = smul.u32 2, %s21
          %s182 = smul.u32 4, %s20
          %p183 = scmp.lt.s32.totalorder %s181, 1
          %s184 = scalar_select %p183, %s181, 1
          %p185 = scmp.lt.s32.totalorder %s182, 7
          %s186 = scalar_select %p185, %s182, 7
          %s187 = smul.addr %s184, 8
          %s188 = sadd.s32 %s186, %s187
          %s189 = smul.addr %s188, 8
          %s190 = scalar_lea.vmem %s3, %s189
          %s191 = smul.u32 2, %s21
          %s192 = smul.u32 4, %s20
        $region20: #{lp_pooling1d_forward.2} parent=15 // pred_fallthru
          _
        // Predicated region
        $region21: #{lp_pooling1d_forward.2} parent=15 // pred_check
          %p193 = pneg %p73
        $region22: #{lp_pooling1d_forward.2} parent=15 // pred_check_branch
          %195 = sbr.rel (%p193) target = $region24
        $region23: #{lp_pooling1d_forward.2} parent=15 // pred_region
          %s196 = smul.u32 4, %s20
          %p197 = scmp.lt.s32.totalorder %s196, 7
          %s198 = scalar_select %p197, %s196, 7
          %s199 = smul.addr %s198, 8
          %s200 = scalar_lea.vmem %s0, %s199
          %s201 = smul.u32 4, %s20
        $region24: #{lp_pooling1d_forward.2} parent=15 // pred_fallthru
          _
        // Predicated region
        $region25: #{lp_pooling1d_forward.2} parent=15 // pred_check
          %p202 = pneg %p99
        $region26: #{lp_pooling1d_forward.2} parent=15 // pred_check_branch
          %204 = sbr.rel (%p202) target = $region28
        $region27: #{lp_pooling1d_forward.2} parent=15 // pred_region
          %s205 = smul.u32 4, %s20
          %p206 = scmp.lt.s32.totalorder %s205, 7
          %s207 = scalar_select %p206, %s205, 7
          %s208 = scalar_lea.vmem %s1, %s207
          %s209 = smul.u32 4, %s20
        $region28: #{lp_pooling1d_forward.2} parent=15 // pred_fallthru
          _
        // Predicated region
        $region29: #{lp_pooling1d_forward.2} parent=15 // pred_check
          %p210 = pneg %p125
        $region30: #{lp_pooling1d_forward.2} parent=15 // pred_check_branch
          %212 = sbr.rel (%p210) target = $region32
        $region31: #{lp_pooling1d_forward.2} parent=15 // pred_region
          %s213 = smul.u32 4, %s20
          %p214 = scmp.lt.s32.totalorder %s213, 7
          %s215 = scalar_select %p214, %s213, 7
          %s216 = scalar_lea.vmem %s2, %s215
          %s217 = smul.u32 4, %s20
        $region32: #{lp_pooling1d_forward.2} parent=15 // pred_fallthru
          _
      $region16: #{lp_pooling1d_forward.2} parent=5 // pred_fallthru
        _
      %p218 = scmp.le.s32.totalorder 1, %s13
      %p219 = scmp.lt.s32.totalorder %s13, 3
      %p220 = pnand %p218, %p219
      %p221 = pneg %p220
      // Predicated region
      $region33: #{lp_pooling1d_forward.2} parent=5 // pred_check
        _
      $region34: #{lp_pooling1d_forward.2} parent=5 // pred_check_branch
        %223 = sbr.rel (%p220) target = $region36
      $region35: #{lp_pooling1d_forward.2} parent=5 // pred_region
        #allocation4 [shape = 'u8[32768]{0}', space=vmem, size = 0x8000, dematerialized = true, scoped, tag = 'FusionAdapter Buffer %fusion.1 = f32[2,8,1024]{2,1,0:T(8,128)} fusion(%param_3.1), kind=kLoop, calls=%fused_computation.1.clone, metadata={op_name="jit(lp_pooling1d_forward)/transpose" stack_frame_id=14}']
        %s224 = ssub.s32 %s13, 1
        %s225 = smul.u32 2, %s23
        %s226 = smul.u32 4, %s22
        %p227 = scmp.lt.s32.totalorder %s225, 1
        %s228 = scalar_select %p227, %s225, 1
        %p229 = scmp.lt.s32.totalorder %s226, 7
        %s230 = scalar_select %p229, %s226, 7
        %s231 = smul.addr %s228, 8
        %s232 = sadd.s32 %s230, %s231
        %s233 = smul.addr %s232, 8
        %s234 = scalar_lea.vmem %s3, %s233
        %p235 = pneg %p53
        %p236 = pneg %p50
        %s237 = smul.u32 4, %s22
        %p238 = scmp.lt.s32.totalorder %s237, 7
        %s239 = scalar_select %p238, %s237, 7
        %s240 = smul.addr %s239, 8
        %s241 = scalar_lea.vmem %s0, %s240
        %p242 = pneg %p79
        %p243 = pneg %p76
        %s244 = smul.u32 4, %s22
        %p245 = scmp.lt.s32.totalorder %s244, 7
        %s246 = scalar_select %p245, %s244, 7
        %s247 = scalar_lea.vmem %s1, %s246
        %p248 = pneg %p105
        %p249 = pneg %p102
        %s250 = smul.u32 4, %s22
        %p251 = scmp.lt.s32.totalorder %s250, 7
        %s252 = scalar_select %p251, %s250, 7
        %s253 = scalar_lea.vmem %s2, %s252
        %p254 = pneg %p131
        %p255 = pneg %p128
        %p256 = pneg %p159
        %p257 = pneg %p156
        %s258 = sand.u32 %s146, 1
        %s259 = scalar_lea.sflag [#allocation3], %s258
        %s260 = sand.u32 %s146, 1
        %s261 = smul.addr %s260, 8
        %s262 = scalar_lea.vmem [#allocation2], %s261
        %s263 = smul.u32 2, %s23
        %s264 = smul.u32 4, %s22
        %p265 = scmp.lt.s32.totalorder %s263, 1
        %s266 = scalar_select %p265, %s263, 1
        %p267 = scmp.lt.s32.totalorder %s264, 7
        %s268 = scalar_select %p267, %s264, 7
        %s269 = smul.addr %s266, 8
        %s270 = sadd.s32 %s268, %s269
        %s271 = smul.addr %s270, 8
        %s272 = scalar_lea.vmem %s3, %s271
        %s273 = smul.u32 2, %s23
        %s274 = smul.u32 4, %s22
        %s275 = smul.u32 4, %s22
        %p276 = scmp.lt.s32.totalorder %s275, 7
        %s277 = scalar_select %p276, %s275, 7
        %s278 = smul.addr %s277, 8
        %s279 = scalar_lea.vmem %s0, %s278
        %s280 = smul.u32 4, %s22
        %s281 = smul.u32 4, %s22
        %p282 = scmp.lt.s32.totalorder %s281, 7
        %s283 = scalar_select %p282, %s281, 7
        %s284 = scalar_lea.vmem %s1, %s283
        %s285 = smul.u32 4, %s22
        %s286 = smul.u32 4, %s22
        %p287 = scmp.lt.s32.totalorder %s286, 7
        %s288 = scalar_select %p287, %s286, 7
        %s289 = scalar_lea.vmem %s2, %s288
        %s290 = smul.u32 4, %s22
        %s291 = smul.u32 2, %s23
        %s292 = smul.u32 4, %s22
        %v293 = vld [vmem:[%s272] sm:$0xff]
        %295 = vst [vmem:[#allocation4] sm:$0xff] %v293
        %s296 = scalar_lea.vmem %s272, 8
        %v297 = vld [vmem:[%s296] sm:$0xff]
        %s298 = scalar_lea.vmem [#allocation4], 8
        %300 = vst [vmem:[%s298] sm:$0xff] %v297
        %s301 = scalar_lea.vmem %s272, 16
        %v302 = vld [vmem:[%s301] sm:$0xff]
        %s303 = scalar_lea.vmem [#allocation4], 16
        %305 = vst [vmem:[%s303] sm:$0xff] %v302
        %s306 = scalar_lea.vmem %s272, 24
        %v307 = vld [vmem:[%s306] sm:$0xff]
        %s308 = scalar_lea.vmem [#allocation4], 24
        %310 = vst [vmem:[%s308] sm:$0xff] %v307
        %s311 = scalar_lea.vmem %s272, 64
        %v312 = vld [vmem:[%s311] sm:$0xff]
        %s313 = scalar_lea.vmem [#allocation4], 32
        %315 = vst [vmem:[%s313] sm:$0xff] %v312
        %s316 = scalar_lea.vmem %s272, 72
        %v317 = vld [vmem:[%s316] sm:$0xff]
        %s318 = scalar_lea.vmem [#allocation4], 40
        %320 = vst [vmem:[%s318] sm:$0xff] %v317
        %s321 = scalar_lea.vmem %s272, 80
        %v322 = vld [vmem:[%s321] sm:$0xff]
        %s323 = scalar_lea.vmem [#allocation4], 48
        %325 = vst [vmem:[%s323] sm:$0xff] %v322
        %s326 = scalar_lea.vmem %s272, 88
        %v327 = vld [vmem:[%s326] sm:$0xff]
        %s328 = scalar_lea.vmem [#allocation4], 56
        %330 = vst [vmem:[%s328] sm:$0xff] %v327
        %v331 = vld [vmem:[#allocation4] sm:$0xff]
        %v332 = vld [vmem:[#allocation4 + $0x8] sm:$0xff]
        %v333 = vld [vmem:[#allocation4 + $0x10] sm:$0xff]
        %v334 = vld [vmem:[#allocation4 + $0x18] sm:$0xff]
        %v335 = vld [vmem:[#allocation4 + $0x20] sm:$0xff]
        %v336 = vld [vmem:[#allocation4 + $0x28] sm:$0xff]
        %v337 = vld [vmem:[#allocation4 + $0x30] sm:$0xff]
        %v338 = vld [vmem:[#allocation4 + $0x38] sm:$0xff]
        %v339 = vld [vmem:[%s284] sm:$0xf]
        %v340 = vld [vmem:[%s289] sm:$0xf]
        %v341 = vld [vmem:[%s279] sm:$0xff]
        %v342 = vld [vmem:[%s279 + $0x8] sm:$0xff]
        %v343 = vld [vmem:[%s279 + $0x10] sm:$0xff]
        %v344 = vld [vmem:[%s279 + $0x18] sm:$0xff]
        %v345 = vand.u32 2147483647, %v331
        %v346 = vand.u32 2147483647, %v332
        %v347 = vand.u32 2147483647, %v333
        %v348 = vand.u32 2147483647, %v334
        %v349 = vand.u32 2147483647, %v335
        %v350 = vand.u32 2147483647, %v336
        %v351 = vand.u32 2147483647, %v337
        %v352 = vand.u32 2147483647, %v338
        %v353 = vadd.f32 %v345, 1e-16
        %v354 = vadd.f32 %v346, 1e-16
        %v355 = vadd.f32 %v347, 1e-16
        %v356 = vadd.f32 %v348, 1e-16
        %v357 = vadd.f32 %v349, 1e-16
        %v358 = vadd.f32 %v350, 1e-16
        %v359 = vadd.f32 %v351, 1e-16
        %v360 = vadd.f32 %v352, 1e-16
        %v362 = vlaneseq
        %v363 = vshrl.u32 %v362, 7
        %v364 = vsub.s32 0, %v363
        %v365 = vrot.slane %v339, %v364
        %v366 = vlaneseq
        %v367 = vshrl.u32 %v366, 7
        %v368 = vsub.s32 1, %v367
        %v369 = vrot.slane %v339, %v368
        %v370 = vlaneseq
        %v371 = vshrl.u32 %v370, 7
        %v372 = vsub.s32 2, %v371
        %v373 = vrot.slane %v339, %v372
        %v374 = vlaneseq
        %v375 = vshrl.u32 %v374, 7
        %v376 = vsub.s32 3, %v375
        %v377 = vrot.slane %v339, %v376
        %v382 = vpow.f32 %v353, %v365
        %v383 = vpow.f32 %v354, %v369
        %v384 = vpow.f32 %v355, %v373
        %v385 = vpow.f32 %v356, %v377
        %v386 = vpow.f32 %v357, %v365
        %v387 = vpow.f32 %v358, %v369
        %v388 = vpow.f32 %v359, %v373
        %v389 = vpow.f32 %v360, %v377
        %v390 = vadd.f32 %v382, 1e-16
        %v391 = vadd.f32 %v383, 1e-16
        %v392 = vadd.f32 %v384, 1e-16
        %v393 = vadd.f32 %v385, 1e-16
        %v394 = vadd.f32 %v386, 1e-16
        %v395 = vadd.f32 %v387, 1e-16
        %v396 = vadd.f32 %v388, 1e-16
        %v397 = vadd.f32 %v389, 1e-16
        %v398 = vmul.f32 %v390, %v341
        %v399 = vmul.f32 %v391, %v342
        %v400 = vmul.f32 %v392, %v343
        %v401 = vmul.f32 %v393, %v344
        %v402 = vmul.f32 %v394, %v341
        %v403 = vmul.f32 %v395, %v342
        %v404 = vmul.f32 %v396, %v343
        %v405 = vmul.f32 %v397, %v344
        %v406 = vrot.slane %v398, 4
        %v407 = vadd.f32 %v398, %v406
        %v408 = vrot.slane %v407, 2
        %v409 = vadd.f32 %v407, %v408
        %v410 = vrot.slane %v409, 1
        %v411 = vadd.f32 %v409, %v410
        %v412 = vrot.slane %v399, 4
        %v413 = vadd.f32 %v399, %v412
        %v414 = vrot.slane %v413, 2
        %v415 = vadd.f32 %v413, %v414
        %v416 = vrot.slane %v415, 1
        %v417 = vadd.f32 %v415, %v416
        %v418 = vrot.slane %v400, 4
        %v419 = vadd.f32 %v400, %v418
        %v420 = vrot.slane %v419, 2
        %v421 = vadd.f32 %v419, %v420
        %v422 = vrot.slane %v421, 1
        %v423 = vadd.f32 %v421, %v422
        %v424 = vrot.slane %v401, 4
        %v425 = vadd.f32 %v401, %v424
        %v426 = vrot.slane %v425, 2
        %v427 = vadd.f32 %v425, %v426
        %v428 = vrot.slane %v427, 1
        %v429 = vadd.f32 %v427, %v428
        %v430 = vrot.slane %v402, 4
        %v431 = vadd.f32 %v402, %v430
        %v432 = vrot.slane %v431, 2
        %v433 = vadd.f32 %v431, %v432
        %v434 = vrot.slane %v433, 1
        %v435 = vadd.f32 %v433, %v434
        %v436 = vrot.slane %v403, 4
        %v437 = vadd.f32 %v403, %v436
        %v438 = vrot.slane %v437, 2
        %v439 = vadd.f32 %v437, %v438
        %v440 = vrot.slane %v439, 1
        %v441 = vadd.f32 %v439, %v440
        %v442 = vrot.slane %v404, 4
        %v443 = vadd.f32 %v404, %v442
        %v444 = vrot.slane %v443, 2
        %v445 = vadd.f32 %v443, %v444
        %v446 = vrot.slane %v445, 1
        %v447 = vadd.f32 %v445, %v446
        %v448 = vrot.slane %v405, 4
        %v449 = vadd.f32 %v405, %v448
        %v450 = vrot.slane %v449, 2
        %v451 = vadd.f32 %v449, %v450
        %v452 = vrot.slane %v451, 1
        %v453 = vadd.f32 %v451, %v452
        %v454 = vadd.f32 %v411, 1e-16
        %v455 = vadd.f32 %v417, 1e-16
        %v456 = vadd.f32 %v423, 1e-16
        %v457 = vadd.f32 %v429, 1e-16
        %v458 = vadd.f32 %v435, 1e-16
        %v459 = vadd.f32 %v441, 1e-16
        %v460 = vadd.f32 %v447, 1e-16
        %v461 = vadd.f32 %v453, 1e-16
        %v463 = vlaneseq
        %v464 = vshrl.u32 %v463, 7
        %v465 = vsub.s32 0, %v464
        %v466 = vrot.slane %v340, %v465
        %v467 = vlaneseq
        %v468 = vshrl.u32 %v467, 7
        %v469 = vsub.s32 1, %v468
        %v470 = vrot.slane %v340, %v469
        %v471 = vlaneseq
        %v472 = vshrl.u32 %v471, 7
        %v473 = vsub.s32 2, %v472
        %v474 = vrot.slane %v340, %v473
        %v475 = vlaneseq
        %v476 = vshrl.u32 %v475, 7
        %v477 = vsub.s32 3, %v476
        %v478 = vrot.slane %v340, %v477
        %v483 = vpow.f32 %v454, %v466
        %v484 = vpow.f32 %v455, %v470
        %v485 = vpow.f32 %v456, %v474
        %v486 = vpow.f32 %v457, %v478
        %v487 = vpow.f32 %v458, %v466
        %v488 = vpow.f32 %v459, %v470
        %v489 = vpow.f32 %v460, %v474
        %v490 = vpow.f32 %v461, %v478
        %v499 = vcombine.low %v483, %v484
        %v500 = vcombine.low %v485, %v486
        %v502 = vunpack.c.l.s4 1966171168
        %v503 = vunpack.c.0.s8 %v502
        %v504 = vlaneseq
        %v505 = vshrl.u32 %v504, 7
        %v506 = vsub.s32 %v503, %v505
        %v507 = vrot.slane %v499, %v506
        %v509 = vunpack.c.l.s4 1966171168
        %v510 = vunpack.c.0.s8 %v509
        %v511 = vlaneseq
        %v512 = vshrl.u32 %v511, 7
        %v513 = vsub.s32 %v510, %v512
        %v514 = vrot.slane %v500, %v513
        %v515 = vcombine.low %v507, %v514
        %v517 = vunpack.c.l.s4 1966171168
        %v518 = vunpack.c.0.s8 %v517
        %v519 = vlaneseq
        %v520 = vshrl.u32 %v519, 7
        %v521 = vsub.s32 %v518, %v520
        %v522 = vrot.slane %v515, %v521
        %v523 = vcombine.low %v487, %v488
        %v524 = vcombine.low %v489, %v490
        %v526 = vunpack.c.l.s4 1966171168
        %v527 = vunpack.c.0.s8 %v526
        %v528 = vlaneseq
        %v529 = vshrl.u32 %v528, 7
        %v530 = vsub.s32 %v527, %v529
        %v531 = vrot.slane %v523, %v530
        %v533 = vunpack.c.l.s4 1966171168
        %v534 = vunpack.c.0.s8 %v533
        %v535 = vlaneseq
        %v536 = vshrl.u32 %v535, 7
        %v537 = vsub.s32 %v534, %v536
        %v538 = vrot.slane %v524, %v537
        %v539 = vcombine.low %v531, %v538
        %v541 = vunpack.c.l.s4 1966171168
        %v542 = vunpack.c.0.s8 %v541
        %v543 = vlaneseq
        %v544 = vshrl.u32 %v543, 7
        %v545 = vsub.s32 %v542, %v544
        %v546 = vrot.slane %v539, %v545
        %v549 = vlaneseq
        %vm550 = vcmp.ge.s32.totalorder %v549, 0
        %vm551 = vcmp.lt.s32.totalorder %v549, 512
        %vm552 = vmand %vm550, %vm551
        %553 = vst.msk [vmem:[%s262] sm:$0xf] %vm552, %v522
        %554 = vst.msk [vmem:[%s262 + $0x4] sm:$0xf] %vm552, %v546
        %s555 = sand.u32 %s146, 1
        %s556 = scalar_lea.sflag [#allocation3], %s555
        %s557 = sand.u32 %s146, 1
        %s558 = smul.addr %s557, 8
        %s559 = scalar_lea.vmem [#allocation2], %s558
        // Predicated region
        $region37: #{lp_pooling1d_forward.2} parent=35 // pred_check
          %p560 = pneg %p156
        $region38: #{lp_pooling1d_forward.2} parent=35 // pred_check_branch
          %562 = sbr.rel (%p560) target = $region40
        $region39: #{lp_pooling1d_forward.2} parent=35 // pred_region
          %s563 = smul.u32 2, %s23
          %s564 = smul.u32 4, %s22
          %s566 = ssub.s32 128, 128
          %567 = vsyncadd %s556, %s566
          %s568 = smul.addr %s563, 8
          %s569 = sadd.s32 %s564, %s568
          %s570 = smul.addr %s569, 16
          %s571 = scalar_lea.hbm %s4, %s570
          %s572 = sshll.u32 %s559, 4
          %s573 = int_to_ptr.vmem [resolvable:$true] %s572
          %578 = dma.vmem_to_hbm [thread:$0]  %s573, 128, %s571, %s556, 64, 128, 4
        $region40: #{lp_pooling1d_forward.2} parent=35 // pred_fallthru
          _
      $region36: #{lp_pooling1d_forward.2} parent=5 // pred_fallthru
        _
      %p579 = scmp.le.s32.totalorder 2, %s13
      // Predicated region
      $region41: #{lp_pooling1d_forward.2} parent=5 // pred_check
        %p580 = pneg %p579
      $region42: #{lp_pooling1d_forward.2} parent=5 // pred_check_branch
        %582 = sbr.rel (%p580) target = $region44
      $region43: #{lp_pooling1d_forward.2} parent=5 // pred_region
        %s583 = ssub.s32 %s13, 2
        // Predicated region
        $region45: #{lp_pooling1d_forward.2} parent=43 // pred_check
          %p584 = pneg %p162
        $region46: #{lp_pooling1d_forward.2} parent=43 // pred_check_branch
          %586 = sbr.rel (%p584) target = $region48
        $region47: #{lp_pooling1d_forward.2} parent=43 // pred_region
          %s587 = sand.u32 %s147, 1
          %s588 = scalar_lea.sflag [#allocation3], %s587
          %s589 = sand.u32 %s147, 1
          %s590 = smul.addr %s589, 8
          %s591 = scalar_lea.vmem [#allocation2], %s590
          %592 = dma.done %s588, 128
        $region48: #{lp_pooling1d_forward.2} parent=43 // pred_fallthru
          _
      $region44: #{lp_pooling1d_forward.2} parent=5 // pred_fallthru
        _
    $region6: #{lp_pooling1d_forward.2} parent=1 // loop_footer
      %s17 = sadd.s32 1, %s13
    $region7: #{lp_pooling1d_forward.2} parent=1 // loop_footer_branch
      %12 = sbr.rel target = $region3
    $region8: #{lp_pooling1d_forward.2} parent=1 // loop_exit
      _
    %593 = vsyncpa [#allocation3], 1
    %s594 = scalar_lea.sflag [#allocation3], 1
    %595 = vsyncpa %s594, 1

</llo_original>
